<compile_context>
chip_gen: v7x
topology: tpu7x:2x2x1
jax: 0.10.0
libtpu: 0.0.40
codegen_flags: <defaults>
</compile_context>

<pallas_src>
import jax
import jax.numpy as jnp
from jax.experimental import pallas as pl
from jax.experimental.pallas import tpu as pltpu

INF_DEFAULT = 100000000.0
REPEAT = 10000   # hard-coded in the PyTorch forward: r.repeat(1, 10000)
SUBLANES = 8     # vreg sublanes
LANES = 128      # vreg lanes


def _make_kernel(nlayers: int, inf: float):
    """Kernel body: `nlayers`-deep MLP + soft_threshold2 on a dense tile."""

    def kernel(d_ref, h_ref, *rest):
        # rest = [W0, b0, ..., W_last(1,nh), b_last(1,1 in SMEM),
        #         out_d_ref(B,8,Lb), out_r_ref(B,128)]
        *wb, out_d_ref, out_r_ref = rest

        # --- tiny MLP (recomputed per grid step; cost is negligible) ---
        x = h_ref[...].astype(jnp.float32)
        for l in range(nlayers - 1):
            W = wb[2 * l][...]
            b = wb[2 * l + 1][...]
            x = jnp.maximum(
                jnp.dot(x, W, preferred_element_type=jnp.float32) + b, 0.0
            )
        w_last = wb[2 * (nlayers - 1)][...]        # (1, n_feat_in) in VMEM
        b_last = wb[2 * (nlayers - 1) + 1][0, 0]   # scalar in SMEM
        r_col = jnp.sum(x * w_last, axis=-1, keepdims=True) + b_last  # (B, 1)

        # --- soft_threshold2 on the lane+sublane-dense block (B, 8, Lb) ---
        d = d_ref[...]
        B = d.shape[0]
        r = jnp.broadcast_to(r_col.reshape(B, 1, 1), d.shape)
        dnew = jnp.where(d > r, d, r - jnp.exp(r - d) + 1.0)
        out_d_ref[...] = jnp.minimum(dnew, inf)

        # Small per-step r block; caller broadcasts to (B, REPEAT) outside.
        out_r_ref[...] = jnp.broadcast_to(r_col, out_r_ref.shape)

    return kernel


def dynamic_threshold_forward(d, hiddens, weights, biases, inf=INF_DEFAULT,
                              num_lane_blocks=2):
    """Pallas implementation of DynamicThreshold.forward (B > 1 path).

    weights[l], biases[l] are (in, out) / (1, out) for the hidden layers;
    the last entries are (1, nhid) / (1, 1) for the final Linear(nhid, 1).
    """
    nlayers = len(weights)
    B, D = d.shape
    assert B > 1, "this kernel reproduces the B > 1 branch (r.repeat(1, 10000))"
    assert D == REPEAT, "d's last dim must match the hard-coded repeat of 10000"

    G = num_lane_blocks
    chunk = SUBLANES * LANES * G
    D_pad = ((D + chunk - 1) // chunk) * chunk      # 10000 -> 10240
    L = D_pad // SUBLANES                           # 1280 lanes per sublane-row
    Lb = L // G                                     # lanes per grid step

    # Pad the tail with `inf` (any value works: padded outputs are sliced off)
    # and view as (B, 8, L) so the kernel sees fully packed vregs.
    d_pad = jnp.pad(d.astype(jnp.float32), ((0, 0), (0, D_pad - D)),
                    constant_values=float(inf))
    d3 = d_pad.reshape(B, SUBLANES, L)

    kernel = _make_kernel(nlayers, float(inf))

    in_arrays = [d3, hiddens]
    in_specs = [
        pl.BlockSpec((B, SUBLANES, Lb), lambda i: (0, 0, i)),
        pl.BlockSpec(hiddens.shape, lambda i: (0, 0)),
    ]
    for l, (W, b) in enumerate(zip(weights, biases)):
        in_arrays.append(W)
        in_specs.append(pl.BlockSpec(W.shape, lambda i: (0, 0)))
        in_arrays.append(b)
        if l == nlayers - 1:
            # final Linear bias is a true scalar -> keep it in SMEM
            in_specs.append(pl.BlockSpec(memory_space=pltpu.MemorySpace.SMEM))
        else:
            in_specs.append(pl.BlockSpec(b.shape, lambda i: (0, 0)))

    out_shape = (
        jax.ShapeDtypeStruct((B, SUBLANES, L), jnp.float32),   # dnew (padded)
        jax.ShapeDtypeStruct((B, G * LANES), jnp.float32),     # r (small block)
    )
    out_specs = (
        pl.BlockSpec((B, SUBLANES, Lb), lambda i: (0, 0, i)),
        pl.BlockSpec((B, LANES), lambda i: (0, i)),
    )

    # Total traffic is tiny; one big dense block per grid step, lane axis split
    # across a 2-wide "parallel" grid so a v7x chip uses both TensorCores.
    out_d3, out_r = pl.pallas_call(
        kernel,
        grid=(G,),
        in_specs=in_specs,
        out_specs=out_specs,
        out_shape=out_shape,
        compiler_params=pltpu.CompilerParams(
            dimension_semantics=("parallel",)
        ),
    )(*in_arrays)

    dnew = out_d3.reshape(B, D_pad)[:, :D]
    r_col = out_r[:, :1]                        # (B, 1)
    r = jnp.broadcast_to(r_col, (B, D))         # == r.repeat(1, 10000)
    return dnew, r


def init_params(key, nin, nhid, nlayers):
    """Deterministic parameter init mirroring the module's shapes.

    Hidden Linear layers: small uniform init. Final Linear: weight ~ U[-5, 0]
    (the module's init_weights uses uniform_(w, 0, -5)), default-ish bias.
    """
    weights, biases = [], []
    keys = jax.random.split(key, 2 * nlayers)
    fan_in = nin
    for l in range(nlayers - 1):
        bound = 1.0 / jnp.sqrt(fan_in)
        W = jax.random.uniform(
            keys[2 * l], (fan_in, nhid), jnp.float32, -bound, bound
        )
        b = jax.random.uniform(
            keys[2 * l + 1], (1, nhid), jnp.float32, -bound, bound
        )
        weights.append(W)
        biases.append(b)
        fan_in = nhid
    # final Linear(fan_in, 1): store weight as (1, fan_in)
    W_last = jax.random.uniform(
        keys[-2], (1, fan_in), jnp.float32, -5.0, 0.0
    )
    bound = 1.0 / jnp.sqrt(fan_in)
    b_last = jax.random.uniform(keys[-1], (1, 1), jnp.float32, -bound, bound)
    weights.append(W_last)
    biases.append(b_last)
    return weights, biases


def reference_forward(d, hiddens, weights, biases, inf=INF_DEFAULT):
    """Pure-JAX reference (matches the PyTorch forward for B > 1)."""
    x = hiddens
    for l in range(len(weights) - 1):
        x = jnp.maximum(x @ weights[l] + biases[l], 0.0)
    r_col = jnp.sum(x * weights[-1], axis=-1, keepdims=True) + biases[-1]
    r = jnp.broadcast_to(r_col, d.shape)
    dnew = jnp.where(d > r, d, r - jnp.exp(r - d) + 1.0)
    return jnp.minimum(dnew, inf), r


if __name__ == "__main__":
    # DynamicThreshold(nin=32, nhid=32, nlayers=2, temp=1.0); temp is unused
    # in the live forward path (only appears in dead code after `return`).
    nin, nhid, nlayers = 32, 32, 2
    B, D = 2, REPEAT

    key = jax.random.PRNGKey(0)
    k_d, k_h, k_p = jax.random.split(key, 3)
    d = jax.random.normal(k_d, (B, D), jnp.float32) * 2.0
    hiddens = jax.random.normal(k_h, (B, nin), jnp.float32)
    weights, biases = init_params(k_p, nin, nhid, nlayers)

    dnew, r = dynamic_threshold_forward(d, hiddens, weights, biases)
    jax.block_until_ready((dnew, r))

    dnew_ref, r_ref = reference_forward(d, hiddens, weights, biases)
    assert dnew.shape == (B, D) and r.shape == (B, D)
    assert jnp.allclose(dnew, dnew_ref, rtol=1e-5, atol=1e-5)
    assert jnp.allclose(r, r_ref, rtol=1e-5, atol=1e-5)

    print("KERNEL_OK")
</pallas_src>

<mosaic_0001>
module attributes {stable_mosaic.version = 11 : i64} {
  func.func @kernel(%arg0: i32, %arg1: memref<2x8x640xf32, #tpu.memory_space<vmem>>, %arg2: memref<2x32xf32, #tpu.memory_space<vmem>>, %arg3: memref<32x32xf32, #tpu.memory_space<vmem>>, %arg4: memref<1x32xf32, #tpu.memory_space<vmem>>, %arg5: memref<1x32xf32, #tpu.memory_space<vmem>>, %arg6: memref<1x1xf32, #tpu.memory_space<smem>>, %arg7: memref<2x8x640xf32, #tpu.memory_space<vmem>>, %arg8: memref<2x128xf32, #tpu.memory_space<vmem>>) attributes {dimension_semantics = [#tpu.dimension_semantics<parallel>], iteration_bounds = array<i64: 2>, scalar_prefetch = 0 : i64, scratch_operands = 0 : i64, tpu.core_type = #tpu.core_type<tc>, window_params = [{transform_indices = @transform_0, window_bounds = array<i64: 2, 8, 640>}, {pipeline_mode = #tpu.pipeline_mode<synchronous>, transform_indices = @transform_1, window_bounds = array<i64: 2, 32>}, {pipeline_mode = #tpu.pipeline_mode<synchronous>, transform_indices = @transform_2, window_bounds = array<i64: 32, 32>}, {pipeline_mode = #tpu.pipeline_mode<synchronous>, transform_indices = @transform_3, window_bounds = array<i64: 1, 32>}, {pipeline_mode = #tpu.pipeline_mode<synchronous>, transform_indices = @transform_4, window_bounds = array<i64: 1, 32>}, {transform_indices = @transform_5, window_bounds = array<i64: 1, 1>}, {transform_indices = @transform_6, window_bounds = array<i64: 2, 8, 640>}, {transform_indices = @transform_7, window_bounds = array<i64: 2, 128>}]} {
    %c0 = arith.constant 0 : index
    %c0_0 = arith.constant 0 : index
    %0 = vector.load %arg2[%c0, %c0_0] : memref<2x32xf32, #tpu.memory_space<vmem>>, vector<2x32xf32>
    %c0_1 = arith.constant 0 : index
    %c0_2 = arith.constant 0 : index
    %1 = vector.load %arg3[%c0_1, %c0_2] : memref<32x32xf32, #tpu.memory_space<vmem>>, vector<32x32xf32>
    %c0_3 = arith.constant 0 : index
    %c0_4 = arith.constant 0 : index
    %2 = vector.load %arg4[%c0_3, %c0_4] : memref<1x32xf32, #tpu.memory_space<vmem>>, vector<1x32xf32>
    %cst = arith.constant dense<0.000000e+00> : vector<2x32xf32>
    %3 = tpu.matmul %0, %1, %cst {dimension_numbers = #tpu.dot_dimension_numbers<[1], [0], [0], [1], [0, 0, 1, 1], [], []>} : vector<2x32xf32>, vector<32x32xf32>, vector<2x32xf32> -> vector<2x32xf32>
    %4 = vector.broadcast %2 : vector<1x32xf32> to vector<2x32xf32>
    %5 = arith.addf %3, %4 : vector<2x32xf32>
    %cst_5 = arith.constant 0.000000e+00 : f32
    %6 = vector.broadcast %cst_5 : f32 to vector<2x32xf32>
    %7 = arith.maximumf %5, %6 : vector<2x32xf32>
    %c0_6 = arith.constant 0 : index
    %c0_7 = arith.constant 0 : index
    %8 = vector.load %arg5[%c0_6, %c0_7] : memref<1x32xf32, #tpu.memory_space<vmem>>, vector<1x32xf32>
    %c0_8 = arith.constant 0 : index
    %c0_9 = arith.constant 0 : index
    %9 = memref.load %arg6[%c0_8, %c0_9] : memref<1x1xf32, #tpu.memory_space<smem>>
    %10 = vector.broadcast %8 : vector<1x32xf32> to vector<2x32xf32>
    %11 = arith.mulf %7, %10 : vector<2x32xf32>
    %cst_10 = arith.constant dense<0.000000e+00> : vector<2xf32>
    %12 = vector.multi_reduction <add>, %11, %cst_10 [1] : vector<2x32xf32> to vector<2xf32>
    %13 = vector.shape_cast %12 : vector<2xf32> to vector<2x1xf32>
    %14 = vector.broadcast %9 : f32 to vector<2x1xf32>
    %15 = arith.addf %13, %14 : vector<2x1xf32>
    %c0_11 = arith.constant 0 : index
    %c0_12 = arith.constant 0 : index
    %c0_13 = arith.constant 0 : index
    %16 = vector.load %arg1[%c0_11, %c0_12, %c0_13] : memref<2x8x640xf32, #tpu.memory_space<vmem>>, vector<2x8x640xf32>
    %17 = vector.shape_cast %15 : vector<2x1xf32> to vector<2x1x1xf32>
    %18 = vector.shape_cast %17 : vector<2x1x1xf32> to vector<2x1x1xf32>
    %19 = vector.broadcast %18 : vector<2x1x1xf32> to vector<2x8x640xf32>
    %20 = arith.cmpf ogt, %16, %19 : vector<2x8x640xf32>
    %21 = arith.subf %19, %16 : vector<2x8x640xf32>
    %22 = math.exp %21 : vector<2x8x640xf32>
    %23 = arith.subf %19, %22 : vector<2x8x640xf32>
    %cst_14 = arith.constant 1.000000e+00 : f32
    %24 = vector.broadcast %cst_14 : f32 to vector<2x8x640xf32>
    %25 = arith.addf %23, %24 : vector<2x8x640xf32>
    %26 = arith.select %20, %16, %25 : vector<2x8x640xi1>, vector<2x8x640xf32>
    %cst_15 = arith.constant 1.000000e+08 : f32
    %27 = vector.broadcast %cst_15 : f32 to vector<2x8x640xf32>
    %28 = arith.minimumf %26, %27 : vector<2x8x640xf32>
    %c0_16 = arith.constant 0 : index
    %c0_17 = arith.constant 0 : index
    %c0_18 = arith.constant 0 : index
    %29 = vector.load %arg7[%c0_16, %c0_17, %c0_18] : memref<2x8x640xf32, #tpu.memory_space<vmem>>, vector<2x8x640xf32>
    tpu.vector_store %arg7[%c0_16, %c0_17, %c0_18], %28 {strides = array<i32>} : memref<2x8x640xf32, #tpu.memory_space<vmem>>, vector<2x8x640xf32>,
    %30 = vector.shape_cast %15 : vector<2x1xf32> to vector<2x1xf32>
    %31 = vector.broadcast %30 : vector<2x1xf32> to vector<2x128xf32>
    %c0_19 = arith.constant 0 : index
    %c0_20 = arith.constant 0 : index
    %32 = vector.load %arg8[%c0_19, %c0_20] : memref<2x128xf32, #tpu.memory_space<vmem>>, vector<2x128xf32>
    tpu.vector_store %arg8[%c0_19, %c0_20], %31 {strides = array<i32>} : memref<2x128xf32, #tpu.memory_space<vmem>>, vector<2x128xf32>,
    return
  }
  func.func @transform_0(%arg0: i32) -> (i32, i32, i32) {
    %c0_i32 = arith.constant 0 : i32
    %c0_i32_0 = arith.constant 0 : i32
    %c0_i32_1 = arith.constant 0 : i32
    return %c0_i32, %c0_i32_0, %arg0 : i32, i32, i32
  }
  func.func @transform_1(%arg0: i32) -> (i32, i32) {
    %c0_i32 = arith.constant 0 : i32
    %c0_i32_0 = arith.constant 0 : i32
    %c0_i32_1 = arith.constant 0 : i32
    return %c0_i32, %c0_i32_0 : i32, i32
  }
  func.func @transform_2(%arg0: i32) -> (i32, i32) {
    %c0_i32 = arith.constant 0 : i32
    %c0_i32_0 = arith.constant 0 : i32
    %c0_i32_1 = arith.constant 0 : i32
    return %c0_i32, %c0_i32_0 : i32, i32
  }
  func.func @transform_3(%arg0: i32) -> (i32, i32) {
    %c0_i32 = arith.constant 0 : i32
    %c0_i32_0 = arith.constant 0 : i32
    %c0_i32_1 = arith.constant 0 : i32
    return %c0_i32, %c0_i32_0 : i32, i32
  }
  func.func @transform_4(%arg0: i32) -> (i32, i32) {
    %c0_i32 = arith.constant 0 : i32
    %c0_i32_0 = arith.constant 0 : i32
    %c0_i32_1 = arith.constant 0 : i32
    return %c0_i32, %c0_i32_0 : i32, i32
  }
  func.func @transform_5(%arg0: i32) -> (i32, i32) {
    %c0_i32 = arith.constant 0 : i32
    %c0_i32_0 = arith.constant 0 : i32
    %c0_i32_1 = arith.constant 0 : i32
    return %c0_i32, %c0_i32_0 : i32, i32
  }
  func.func @transform_6(%arg0: i32) -> (i32, i32, i32) {
    %c0_i32 = arith.constant 0 : i32
    %c0_i32_0 = arith.constant 0 : i32
    %c0_i32_1 = arith.constant 0 : i32
    return %c0_i32, %c0_i32_0, %arg0 : i32, i32, i32
  }
  func.func @transform_7(%arg0: i32) -> (i32, i32) {
    %c0_i32 = arith.constant 0 : i32
    %c0_i32_0 = arith.constant 0 : i32
    return %c0_i32, %arg0 : i32, i32
  }
}

</mosaic_0001>

<llo_original>
// kernel: tpu_custom_call.1
$region0: #{tpu_custom_call.1}
  #allocation0 [shape = 'u32[]', space=smem, size = 0x4, offset = 0x4, fixed_abs, tag = 'smem constant byte address 0x4 - core index']
  #allocation1 [shape = 'u32[144,128]{1,0:T(1,128)}', space=vmem, size = 0x12000, scoped, tag = 'internal scratch']
  #allocation2 [shape = 'f32[1,1]{1,0:T(1,128)S(6)}', space=smem, size = 0x200, scoped, tag = 'scoped memory for tpu_custom_call.1']
  %s0 = inlined_call_operand.hbm [shape: f32[2,8,1280], index: 0, kind: input, shape index: {}]
  %s1 = inlined_call_operand.vmem [shape: f32[2,32], index: 1, kind: input, shape index: {}]
  %s2 = inlined_call_operand.hbm [shape: f32[32,32], index: 2, kind: input, shape index: {}]
  %s3 = inlined_call_operand.vmem [shape: f32[1,32], index: 3, kind: input, shape index: {}]
  %s4 = inlined_call_operand.vmem [shape: f32[1,32], index: 4, kind: input, shape index: {}]
  %s5 = inlined_call_operand.<no memory space> [shape: f32[1,1], index: 5, kind: input, shape index: {}]
  %s6 = inlined_call_operand.hbm [shape: f32[2,8,1280], index: 6, kind: output, shape index: {0}]
  %s7 = inlined_call_operand.hbm [shape: f32[2,256], index: 7, kind: output, shape index: {1}]
  %8 = xla_tuple %s6, %s7
  %s9 = sld [smem:[#allocation0]]
  $region73: #{tpu_custom_call.1} parent=0
    _
  %s11 = ssub.s32 1, %s9
  %s12 = scalar_select 0, %s11, %s9
  %13 = sst [smem:[#allocation2]] %s5
  $region1: #{tpu_custom_call.1} parent=0
    #allocation3 [shape = 'u8[81920]{0}', space=vmem, size = 0x14000, scoped, tag = 'input window, operand 0']
    #allocation4 [shape = 's32[2]{0}', space=sflag, size = 0x8, scoped, tag = 'scoped memory for tpu_custom_call.1']
    #allocation5 [shape = 's32[2]{0}', space=sflag, size = 0x8, scoped, tag = 'scoped memory for tpu_custom_call.1']
    #allocation6 [shape = 'u8[16384]{0}', space=vmem, size = 0x4000, scoped, tag = 'input window, operand 2, single buffered']
    #allocation7 [shape = 's32[1]{0}', space=sflag, size = 0x4, scoped, tag = 'scoped memory for tpu_custom_call.1']
    #allocation8 [shape = 'u8[81920]{0}', space=vmem, size = 0x14000, scoped, tag = 'output window, operand 0']
    #allocation9 [shape = 'u8[2048]{0}', space=vmem, size = 0x800, scoped, tag = 'output window, operand 1']
    #allocation10 [shape = 's32[2]{0}', space=sflag, size = 0x8, scoped, tag = 'scoped memory for tpu_custom_call.1']
    %14 = vsyncpa [#allocation4], 0
    %s15 = scalar_lea.sflag [#allocation4], 1
    %16 = vsyncpa %s15, 0
    %17 = vsyncpa [#allocation7], 0
    %18 = vsyncpa [#allocation5], 0
    %s19 = scalar_lea.sflag [#allocation5], 1
    %20 = vsyncpa %s19, 0
    %21 = vsyncpa [#allocation10], 0
    %s22 = scalar_lea.sflag [#allocation10], 1
    %23 = vsyncpa %s22, 0
    loop: start=0, step=1, limit=4
    $region2: #{tpu_custom_call.1} parent=1 // loop_pre_header
      _
    $region3: #{tpu_custom_call.1} parent=1 // loop_header
      %s25 = sphi 0, %s29
      %p26 = scmp.ge.s32.totalorder %s25, 4
      %s35 = sphi 0, %s37
      %s38 = sphi 0, %s35
      %s39 = sphi 0, %s38
      %s55 = sphi 0, %s39
      %s59 = sphi 0, %s59
      %s61 = sphi 0, %s59
      %s62 = sphi 0, %s61
      %s76 = sphi 0, %s62
      %s80 = sphi 0, %s80
      %s82 = sphi 0, %s80
      %s83 = sphi 0, %s82
      %s97 = sphi 0, %s83
      %s101 = sphi 0, %s101
      %s103 = sphi 0, %s101
      %s104 = sphi 0, %s103
      %s118 = sphi 0, %s104
      %s122 = sphi 0, %s122
      %s124 = sphi 0, %s122
      %s125 = sphi 0, %s124
      %s139 = sphi 0, %s125
      %s143 = sphi 0, %s143
      %s145 = sphi 0, %s143
      %s146 = sphi 0, %s145
      %s160 = sphi 0, %s146
      %s166 = sphi 0, %s168
      %s169 = sphi 0, %s166
      %s170 = sphi 0, %s169
      %s186 = sphi 0, %s170
      %s192 = sphi 0, %s194
      %s195 = sphi 0, %s192
      %s196 = sphi 0, %s195
      %s212 = sphi 0, %s196
    $region4: #{tpu_custom_call.1} parent=1 // loop_header_branch
      %28 = sbr.rel (%p26) target = $region8
    $region5: #{tpu_custom_call.1} parent=1 // loop_body
      %s30 = ssub.s32 %s25, 1
      %s31 = ssub.s32 %s25, 2
      %s32 = sadd.s32 %s25, 1
      %s33 = ssub.s32 %s25, %s32
      %p34 = scmp.eq.s32.totalorder %s33, 0
      %s36 = sadd.s32 %s35, 1
      %s37 = scalar_select %p34, %s35, %s36
      %p40 = pneg %p34
      %p41 = scmp.eq.s32.totalorder %s25, 1
      %p42 = por %p40, %p41
      %p43 = scmp.ne.s32.totalorder %s35, %s38
      %p44 = scmp.eq.s32.totalorder %s25, 0
      %p45 = por %p43, %p44
      %p46 = scmp.ne.s32.totalorder %s35, %s38
      %p47 = scmp.eq.s32.totalorder %s30, 1
      %p48 = por %p46, %p47
      %p49 = scmp.ne.s32.totalorder %s38, %s39
      %p50 = scmp.eq.s32.totalorder %s30, 0
      %p51 = por %p49, %p50
      %p52 = scmp.ne.s32.totalorder %s38, %s39
      %p53 = scmp.eq.s32.totalorder %s31, 1
      %p54 = por %p52, %p53
      %p56 = scmp.ne.s32.totalorder %s39, %s55
      %p57 = scmp.eq.s32.totalorder %s31, 0
      %p58 = por %p56, %p57
      %s60 = sadd.s32 %s59, 1
      %p63 = scmp.eq.s32.totalorder %s25, 1
      %p64 = scmp.ne.s32.totalorder %s59, %s61
      %p65 = scmp.eq.s32.totalorder %s25, 0
      %p66 = por %p64, %p65
      %p67 = scmp.ne.s32.totalorder %s59, %s61
      %p68 = scmp.eq.s32.totalorder %s30, 1
      %p69 = por %p67, %p68
      %p70 = scmp.ne.s32.totalorder %s61, %s62
      %p71 = scmp.eq.s32.totalorder %s30, 0
      %p72 = por %p70, %p71
      %p73 = scmp.ne.s32.totalorder %s61, %s62
      %p74 = scmp.eq.s32.totalorder %s31, 1
      %p75 = por %p73, %p74
      %p77 = scmp.ne.s32.totalorder %s62, %s76
      %p78 = scmp.eq.s32.totalorder %s31, 0
      %p79 = por %p77, %p78
      %s81 = sadd.s32 %s80, 1
      %p84 = scmp.eq.s32.totalorder %s25, 1
      %p85 = scmp.ne.s32.totalorder %s80, %s82
      %p86 = scmp.eq.s32.totalorder %s25, 0
      %p87 = por %p85, %p86
      %p88 = scmp.ne.s32.totalorder %s80, %s82
      %p89 = scmp.eq.s32.totalorder %s30, 1
      %p90 = por %p88, %p89
      %p91 = scmp.ne.s32.totalorder %s82, %s83
      %p92 = scmp.eq.s32.totalorder %s30, 0
      %p93 = por %p91, %p92
      %p94 = scmp.ne.s32.totalorder %s82, %s83
      %p95 = scmp.eq.s32.totalorder %s31, 1
      %p96 = por %p94, %p95
      %p98 = scmp.ne.s32.totalorder %s83, %s97
      %p99 = scmp.eq.s32.totalorder %s31, 0
      %p100 = por %p98, %p99
      %s102 = sadd.s32 %s101, 1
      %p105 = scmp.eq.s32.totalorder %s25, 1
      %p106 = scmp.ne.s32.totalorder %s101, %s103
      %p107 = scmp.eq.s32.totalorder %s25, 0
      %p108 = por %p106, %p107
      %p109 = scmp.ne.s32.totalorder %s101, %s103
      %p110 = scmp.eq.s32.totalorder %s30, 1
      %p111 = por %p109, %p110
      %p112 = scmp.ne.s32.totalorder %s103, %s104
      %p113 = scmp.eq.s32.totalorder %s30, 0
      %p114 = por %p112, %p113
      %p115 = scmp.ne.s32.totalorder %s103, %s104
      %p116 = scmp.eq.s32.totalorder %s31, 1
      %p117 = por %p115, %p116
      %p119 = scmp.ne.s32.totalorder %s104, %s118
      %p120 = scmp.eq.s32.totalorder %s31, 0
      %p121 = por %p119, %p120
      %s123 = sadd.s32 %s122, 1
      %p126 = scmp.eq.s32.totalorder %s25, 1
      %p127 = scmp.ne.s32.totalorder %s122, %s124
      %p128 = scmp.eq.s32.totalorder %s25, 0
      %p129 = por %p127, %p128
      %p130 = scmp.ne.s32.totalorder %s122, %s124
      %p131 = scmp.eq.s32.totalorder %s30, 1
      %p132 = por %p130, %p131
      %p133 = scmp.ne.s32.totalorder %s124, %s125
      %p134 = scmp.eq.s32.totalorder %s30, 0
      %p135 = por %p133, %p134
      %p136 = scmp.ne.s32.totalorder %s124, %s125
      %p137 = scmp.eq.s32.totalorder %s31, 1
      %p138 = por %p136, %p137
      %p140 = scmp.ne.s32.totalorder %s125, %s139
      %p141 = scmp.eq.s32.totalorder %s31, 0
      %p142 = por %p140, %p141
      %s144 = sadd.s32 %s143, 1
      %p147 = scmp.eq.s32.totalorder %s25, 1
      %p148 = scmp.ne.s32.totalorder %s143, %s145
      %p149 = scmp.eq.s32.totalorder %s25, 0
      %p150 = por %p148, %p149
      %p151 = scmp.ne.s32.totalorder %s143, %s145
      %p152 = scmp.eq.s32.totalorder %s30, 1
      %p153 = por %p151, %p152
      %p154 = scmp.ne.s32.totalorder %s145, %s146
      %p155 = scmp.eq.s32.totalorder %s30, 0
      %p156 = por %p154, %p155
      %p157 = scmp.ne.s32.totalorder %s145, %s146
      %p158 = scmp.eq.s32.totalorder %s31, 1
      %p159 = por %p157, %p158
      %p161 = scmp.ne.s32.totalorder %s146, %s160
      %p162 = scmp.eq.s32.totalorder %s31, 0
      %p163 = por %p161, %p162
      %s164 = ssub.s32 %s25, %s32
      %p165 = scmp.eq.s32.totalorder %s164, 0
      %s167 = sadd.s32 %s166, 1
      %s168 = scalar_select %p165, %s166, %s167
      %p171 = pneg %p165
      %p172 = scmp.eq.s32.totalorder %s25, 1
      %p173 = por %p171, %p172
      %p174 = scmp.ne.s32.totalorder %s166, %s169
      %p175 = scmp.eq.s32.totalorder %s25, 0
      %p176 = por %p174, %p175
      %p177 = scmp.ne.s32.totalorder %s166, %s169
      %p178 = scmp.eq.s32.totalorder %s30, 1
      %p179 = por %p177, %p178
      %p180 = scmp.ne.s32.totalorder %s169, %s170
      %p181 = scmp.eq.s32.totalorder %s30, 0
      %p182 = por %p180, %p181
      %p183 = scmp.ne.s32.totalorder %s169, %s170
      %p184 = scmp.eq.s32.totalorder %s31, 1
      %p185 = por %p183, %p184
      %p187 = scmp.ne.s32.totalorder %s170, %s186
      %p188 = scmp.eq.s32.totalorder %s31, 0
      %p189 = por %p187, %p188
      %s190 = ssub.s32 %s25, %s32
      %p191 = scmp.eq.s32.totalorder %s190, 0
      %s193 = sadd.s32 %s192, 1
      %s194 = scalar_select %p191, %s192, %s193
      %p197 = pneg %p191
      %p198 = scmp.eq.s32.totalorder %s25, 1
      %p199 = por %p197, %p198
      %p200 = scmp.ne.s32.totalorder %s192, %s195
      %p201 = scmp.eq.s32.totalorder %s25, 0
      %p202 = por %p200, %p201
      %p203 = scmp.ne.s32.totalorder %s192, %s195
      %p204 = scmp.eq.s32.totalorder %s30, 1
      %p205 = por %p203, %p204
      %p206 = scmp.ne.s32.totalorder %s195, %s196
      %p207 = scmp.eq.s32.totalorder %s30, 0
      %p208 = por %p206, %p207
      %p209 = scmp.ne.s32.totalorder %s195, %s196
      %p210 = scmp.eq.s32.totalorder %s31, 1
      %p211 = por %p209, %p210
      %p213 = scmp.ne.s32.totalorder %s196, %s212
      %p214 = scmp.eq.s32.totalorder %s31, 0
      %p215 = por %p213, %p214
      %p216 = scmp.le.s32.totalorder 1, %s25
      %p217 = scmp.lt.s32.totalorder %s25, 3
      %p218 = pnand %p216, %p217
      %p219 = pneg %p218
      // Predicated region
      $region9: #{tpu_custom_call.1} parent=5 // pred_check
        _
      $region10: #{tpu_custom_call.1} parent=5 // pred_check_branch
        %221 = sbr.rel (%p218) target = $region12
      $region11: #{tpu_custom_call.1} parent=5 // pred_region
        %s222 = ssub.s32 %s25, 1
        // Predicated region
        $region13: #{tpu_custom_call.1} parent=11 // pred_check
          %p223 = pneg %p72
        $region14: #{tpu_custom_call.1} parent=11 // pred_check_branch
          %225 = sbr.rel (%p223) target = $region16
        $region15: #{tpu_custom_call.1} parent=11 // pred_region
          _
        $region16: #{tpu_custom_call.1} parent=11 // pred_fallthru
          _
        // Predicated region
        $region17: #{tpu_custom_call.1} parent=11 // pred_check
          %p226 = pneg %p93
        $region18: #{tpu_custom_call.1} parent=11 // pred_check_branch
          %228 = sbr.rel (%p226) target = $region20
        $region19: #{tpu_custom_call.1} parent=11 // pred_region
          %s230 = ssub.s32 512, 512
          %231 = vsyncadd [#allocation7], %s230
          %s232 = sshll.u32 [#allocation6], 4
          %s233 = int_to_ptr.vmem [resolvable:$true] %s232
          %238 = dma.hbm_to_vmem [thread:$0]  %s2, 512, %s233, [#allocation7], 128, 128, 8
        $region20: #{tpu_custom_call.1} parent=11 // pred_fallthru
          _
        // Predicated region
        $region21: #{tpu_custom_call.1} parent=11 // pred_check
          %p239 = pneg %p114
        $region22: #{tpu_custom_call.1} parent=11 // pred_check_branch
          %241 = sbr.rel (%p239) target = $region24
        $region23: #{tpu_custom_call.1} parent=11 // pred_region
          _
        $region24: #{tpu_custom_call.1} parent=11 // pred_fallthru
          _
        // Predicated region
        $region25: #{tpu_custom_call.1} parent=11 // pred_check
          %p242 = pneg %p135
        $region26: #{tpu_custom_call.1} parent=11 // pred_check_branch
          %244 = sbr.rel (%p242) target = $region28
        $region27: #{tpu_custom_call.1} parent=11 // pred_region
          _
        $region28: #{tpu_custom_call.1} parent=11 // pred_fallthru
          _
        // Predicated region
        $region29: #{tpu_custom_call.1} parent=11 // pred_check
          %p245 = pneg %p156
        $region30: #{tpu_custom_call.1} parent=11 // pred_check_branch
          %247 = sbr.rel (%p245) target = $region32
        $region31: #{tpu_custom_call.1} parent=11 // pred_region
          _
        $region32: #{tpu_custom_call.1} parent=11 // pred_fallthru
          _
      $region12: #{tpu_custom_call.1} parent=5 // pred_fallthru
        _
      %p248 = scmp.lt.s32.totalorder %s25, 2
      // Predicated region
      $region33: #{tpu_custom_call.1} parent=5 // pred_check
        %p249 = pneg %p248
      $region34: #{tpu_custom_call.1} parent=5 // pred_check_branch
        %251 = sbr.rel (%p249) target = $region36
      $region35: #{tpu_custom_call.1} parent=5 // pred_region
        // Predicated region
        $region37: #{tpu_custom_call.1} parent=35 // pred_check
          %p252 = pneg %p45
        $region38: #{tpu_custom_call.1} parent=35 // pred_check_branch
          %254 = sbr.rel (%p252) target = $region40
        $region39: #{tpu_custom_call.1} parent=35 // pred_region
          %s255 = sand.u32 %s35, 1
          %s256 = scalar_lea.sflag [#allocation4], %s255
          %s257 = sand.u32 %s35, 1
          %s258 = smul.addr %s257, 80
          %s259 = scalar_lea.vmem [#allocation3], %s258
          %s260 = smul.u32 5, %s25
          %s262 = ssub.s32 1280, 1280
          %263 = vsyncadd %s256, %s262
          %s264 = smul.addr %s260, 128
          %s265 = scalar_lea.hbm %s0, %s264
          %s266 = sshll.u32 %s259, 4
          %s267 = int_to_ptr.vmem [resolvable:$true] %s266
          %272 = dma.hbm_to_vmem [thread:$0]  %s265, 1280, %s267, %s256, 1280, 640, 40
        $region40: #{tpu_custom_call.1} parent=35 // pred_fallthru
          _
      $region36: #{tpu_custom_call.1} parent=5 // pred_fallthru
        _
      %p273 = scmp.le.s32.totalorder 1, %s25
      %p274 = scmp.lt.s32.totalorder %s25, 3
      %p275 = pnand %p273, %p274
      %p276 = pneg %p275
      // Predicated region
      $region41: #{tpu_custom_call.1} parent=5 // pred_check
        _
      $region42: #{tpu_custom_call.1} parent=5 // pred_check_branch
        %278 = sbr.rel (%p275) target = $region44
      $region43: #{tpu_custom_call.1} parent=5 // pred_region
        %s279 = ssub.s32 %s25, 1
        %s280 = sand.u32 %s38, 1
        %s281 = scalar_lea.sflag [#allocation4], %s280
        %s282 = sand.u32 %s38, 1
        %s283 = smul.addr %s282, 80
        %s284 = scalar_lea.vmem [#allocation3], %s283
        // Predicated region
        $region45: #{tpu_custom_call.1} parent=43 // pred_check
          %p285 = pneg %p51
        $region46: #{tpu_custom_call.1} parent=43 // pred_check_branch
          %287 = sbr.rel (%p285) target = $region48
        $region47: #{tpu_custom_call.1} parent=43 // pred_region
          %288 = dma.done %s281, 1280
        $region48: #{tpu_custom_call.1} parent=43 // pred_fallthru
          _
        // Predicated region
        $region49: #{tpu_custom_call.1} parent=43 // pred_check
          %p289 = pneg %p93
        $region50: #{tpu_custom_call.1} parent=43 // pred_check_branch
          %291 = sbr.rel (%p289) target = $region52
        $region51: #{tpu_custom_call.1} parent=43 // pred_region
          %292 = dma.done [#allocation7], 512
        $region52: #{tpu_custom_call.1} parent=43 // pred_fallthru
          _
        %s293 = sand.u32 %s38, 1
        %s294 = scalar_lea.sflag [#allocation4], %s293
        %s295 = sand.u32 %s38, 1
        %s296 = smul.addr %s295, 80
        %s297 = scalar_lea.vmem [#allocation3], %s296
        %p298 = pneg %p51
        %p299 = pneg %p48
        %p300 = pneg %p72
        %p301 = pneg %p69
        %p302 = pneg %p93
        %p303 = pneg %p90
        %p304 = pneg %p114
        %p305 = pneg %p111
        %p306 = pneg %p135
        %p307 = pneg %p132
        %p308 = pneg %p156
        %p309 = pneg %p153
        %p310 = pneg %p182
        %p311 = pneg %p179
        %s312 = sand.u32 %s169, 1
        %s313 = scalar_lea.sflag [#allocation5], %s312
        %s314 = sand.u32 %s169, 1
        %s315 = smul.addr %s314, 80
        %s316 = scalar_lea.vmem [#allocation8], %s315
        %p317 = pneg %p208
        %p318 = pneg %p205
        %s319 = sand.u32 %s195, 1
        %s320 = scalar_lea.sflag [#allocation10], %s319
        %s321 = sand.u32 %s195, 1
        %s322 = smul.addr %s321, 2
        %s323 = scalar_lea.vmem [#allocation9], %s322
        %s324 = smul.u32 5, %s30
        %s325 = smul.u32 5, %s30
        %v326 = vld [vmem:[%s1] sm:$0x3]
        %v327 = vld [vmem:[#allocation6] sm:$0xff]
        %v328 = vld [vmem:[#allocation6 + $0x8] sm:$0xff]
        %v329 = vld [vmem:[#allocation6 + $0x10] sm:$0xff]
        %v330 = vld [vmem:[#allocation6 + $0x18] sm:$0xff]
        %v331 = vld [vmem:[%s3] sm:$0x1]
        %v333 = vlaneseq
        %v334 = vshrl.u32 %v333, 7
        %v335 = vsub.s32 0, %v334
        %v336 = vrot.slane %v331, %v335
        %vm338 = vcmask 261120
        %v340 = vsel %vm338, %v326, 0
        %342 = vmatprep.subr.mxu0 0.0
        %343 = vmatpush1.msra.mxu0 %v327
        %344 = vmatprep.subr.mxu0 0.0
        %345 = vmatpush1.msra.mxu0 %v328
        %346 = vmatprep.subr.mxu0 0.0
        %347 = vmatpush1.msra.mxu0 %v329
        %348 = vmatprep.subr.mxu0 0.0
        %349 = vmatpush1.msra.mxu0 %v330
        %350 = vmatprep.subr.mxu0 0.0
        %351 = vmatpush1.msra.mxu0 0.0
        %352 = vmatprep.subr.mxu0 0.0
        %353 = vmatpush1.msra.mxu0 0.0
        %354 = vmatprep.subr.mxu0 0.0
        %355 = vmatpush1.msra.mxu0 0.0
        %356 = vmatprep.subr.mxu0 0.0
        %357 = vmatpush1.msra.mxu0 0.0
        %358 = vmatprep.subr.mxu0 0.0
        %359 = vmatpush1.msra.mxu0 0.0
        %360 = vmatprep.subr.mxu0 0.0
        %361 = vmatpush1.msra.mxu0 0.0
        %362 = vmatprep.subr.mxu0 0.0
        %363 = vmatpush1.msra.mxu0 0.0
        %364 = vmatprep.subr.mxu0 0.0
        %365 = vmatpush1.msra.mxu0 0.0
        %366 = vmatprep.subr.mxu0 0.0
        %367 = vmatpush1.msra.mxu0 0.0
        %368 = vmatprep.subr.mxu0 0.0
        %369 = vmatpush1.msra.mxu0 0.0
        %370 = vmatprep.subr.mxu0 0.0
        %371 = vmatpush1.msra.mxu0 0.0
        %372 = vmatprep.subr.mxu0 0.0
        %373 = vmatpush1.msra.mxu0 0.0
        %374 = vmatprep.subr.mxu0 0.0
        %375 = vmatpush1.msra.mxu0 0.0
        %376 = vmatprep.subr.mxu0 0.0
        %377 = vmatpush1.msra.mxu0 0.0
        %378 = vmatprep.subr.mxu0 0.0
        %379 = vmatpush1.msra.mxu0 0.0
        %380 = vmatprep.subr.mxu0 0.0
        %381 = vmatpush1.msra.mxu0 0.0
        %382 = vmatprep.subr.mxu0 0.0
        %383 = vmatpush1.msra.mxu0 0.0
        %384 = vmatprep.subr.mxu0 0.0
        %385 = vmatpush1.msra.mxu0 0.0
        %386 = vmatprep.subr.mxu0 0.0
        %387 = vmatpush1.msra.mxu0 0.0
        %388 = vmatprep.subr.mxu0 0.0
        %389 = vmatpush1.msra.mxu0 0.0
        %390 = vmatprep.subr.mxu0 0.0
        %391 = vmatpush1.msra.mxu0 0.0
        %392 = vmatprep.subr.mxu0 0.0
        %393 = vmatpush1.msra.mxu0 0.0
        %394 = vmatprep.subr.mxu0 0.0
        %395 = vmatpush1.msra.mxu0 0.0
        %396 = vmatprep.subr.mxu0 0.0
        %397 = vmatpush1.msra.mxu0 0.0
        %398 = vmatprep.subr.mxu0 0.0
        %399 = vmatpush1.msra.mxu0 0.0
        %400 = vmatprep.subr.mxu0 0.0
        %401 = vmatpush1.msra.mxu0 0.0
        %402 = vmatprep.subr.mxu0 0.0
        %403 = vmatpush1.msra.mxu0 0.0
        %404 = vmatprep.subr.mxu0 0.0
        %405 = vmatpush1.msra.mxu0 0.0
        %406 = vmatprep.mubr.f32.mxu0 0.0
        %407 = vmatmul.mubr.f32.gmra.mrb[0].mxu0 %v340
        %v408 = vpop.f32.mrb[0].mxu0
        %v409 = vadd.f32 %v336, %v408
        %v410 = vpop.f32.mrb[0].mxu0
        %411 = vdwg.mxu0
        %v412 = vmax.f32 %v409, 0.0
        %v413 = vld [vmem:[%s4] sm:$0x1]
        %s414 = sld [smem:[#allocation2]]
        %v416 = vlaneseq
        %v417 = vshrl.u32 %v416, 7
        %v418 = vsub.s32 0, %v417
        %v419 = vrot.slane %v413, %v418
        %v421 = vmul.f32 %v412, %v419
        %vm422 = vcmask 254976
        %v423 = vsel %vm422, %v421, 0.0
        %424 = vadd.xlane.f32.xlu0 %v423
        %v425 = vpop.xlane.xlu0 %424
        %v426 = vstv %s414
        %v427 = vadd.f32 %v425, %v426
        %v428 = vld [vmem:[%s284] sm:$0xff]
        %v429 = vld [vmem:[%s284 + $0x8] sm:$0xff]
        %v430 = vld [vmem:[%s284 + $0x10] sm:$0xff]
        %v431 = vld [vmem:[%s284 + $0x18] sm:$0xff]
        %v432 = vld [vmem:[%s284 + $0x20] sm:$0xff]
        %v433 = vld [vmem:[%s284 + $0x28] sm:$0xff]
        %v434 = vld [vmem:[%s284 + $0x30] sm:$0xff]
        %v435 = vld [vmem:[%s284 + $0x38] sm:$0xff]
        %v436 = vld [vmem:[%s284 + $0x40] sm:$0xff]
        %v437 = vld [vmem:[%s284 + $0x48] sm:$0xff]
        %v439 = vlaneseq
        %v440 = vshrl.u32 %v439, 7
        %v441 = vsub.s32 0, %v440
        %v442 = vrot.slane %v427, %v441
        %v443 = vlaneseq
        %v444 = vshrl.u32 %v443, 7
        %v445 = vsub.s32 1, %v444
        %v446 = vrot.slane %v427, %v445
        %vm449 = vcmp.gt.f32.partialorder %v428, %v442
        %vm450 = vcmp.gt.f32.partialorder %v429, %v442
        %vm451 = vcmp.gt.f32.partialorder %v430, %v442
        %vm452 = vcmp.gt.f32.partialorder %v431, %v442
        %vm453 = vcmp.gt.f32.partialorder %v432, %v442
        %vm454 = vcmp.gt.f32.partialorder %v433, %v446
        %vm455 = vcmp.gt.f32.partialorder %v434, %v446
        %vm456 = vcmp.gt.f32.partialorder %v435, %v446
        %vm457 = vcmp.gt.f32.partialorder %v436, %v446
        %vm458 = vcmp.gt.f32.partialorder %v437, %v446
        %v459 = vsub.f32 %v442, %v428
        %v460 = vsub.f32 %v442, %v429
        %v461 = vsub.f32 %v442, %v430
        %v462 = vsub.f32 %v442, %v431
        %v463 = vsub.f32 %v442, %v432
        %v464 = vsub.f32 %v446, %v433
        %v465 = vsub.f32 %v446, %v434
        %v466 = vsub.f32 %v446, %v435
        %v467 = vsub.f32 %v446, %v436
        %v468 = vsub.f32 %v446, %v437
        %v469 = vmul.f32 %v459, 1.442695
        %v470 = vpow.pop %v469
        %v471 = vmul.f32 %v460, 1.442695
        %v472 = vpow.pop %v471
        %v473 = vmul.f32 %v461, 1.442695
        %v474 = vpow.pop %v473
        %v475 = vmul.f32 %v462, 1.442695
        %v476 = vpow.pop %v475
        %v477 = vmul.f32 %v463, 1.442695
        %v478 = vpow.pop %v477
        %v479 = vmul.f32 %v464, 1.442695
        %v480 = vpow.pop %v479
        %v481 = vmul.f32 %v465, 1.442695
        %v482 = vpow.pop %v481
        %v483 = vmul.f32 %v466, 1.442695
        %v484 = vpow.pop %v483
        %v485 = vmul.f32 %v467, 1.442695
        %v486 = vpow.pop %v485
        %v487 = vmul.f32 %v468, 1.442695
        %v488 = vpow.pop %v487
        %v489 = vsub.f32 %v442, %v470
        %v490 = vsub.f32 %v442, %v472
        %v491 = vsub.f32 %v442, %v474
        %v492 = vsub.f32 %v442, %v476
        %v493 = vsub.f32 %v442, %v478
        %v494 = vsub.f32 %v446, %v480
        %v495 = vsub.f32 %v446, %v482
        %v496 = vsub.f32 %v446, %v484
        %v497 = vsub.f32 %v446, %v486
        %v498 = vsub.f32 %v446, %v488
        %v499 = vadd.f32 %v489, 1.0
        %v500 = vadd.f32 %v490, 1.0
        %v501 = vadd.f32 %v491, 1.0
        %v502 = vadd.f32 %v492, 1.0
        %v503 = vadd.f32 %v493, 1.0
        %v504 = vadd.f32 %v494, 1.0
        %v505 = vadd.f32 %v495, 1.0
        %v506 = vadd.f32 %v496, 1.0
        %v507 = vadd.f32 %v497, 1.0
        %v508 = vadd.f32 %v498, 1.0
        %v509 = vsel %vm449, %v428, %v499
        %v510 = vsel %vm450, %v429, %v500
        %v511 = vsel %vm451, %v430, %v501
        %v512 = vsel %vm452, %v431, %v502
        %v513 = vsel %vm453, %v432, %v503
        %v514 = vsel %vm454, %v433, %v504
        %v515 = vsel %vm455, %v434, %v505
        %v516 = vsel %vm456, %v435, %v506
        %v517 = vsel %vm457, %v436, %v507
        %v518 = vsel %vm458, %v437, %v508
        %v519 = vmin.f32 %v509, 1e+08
        %v520 = vmin.f32 %v510, 1e+08
        %v521 = vmin.f32 %v511, 1e+08
        %v522 = vmin.f32 %v512, 1e+08
        %v523 = vmin.f32 %v513, 1e+08
        %v524 = vmin.f32 %v514, 1e+08
        %v525 = vmin.f32 %v515, 1e+08
        %v526 = vmin.f32 %v516, 1e+08
        %v527 = vmin.f32 %v517, 1e+08
        %v528 = vmin.f32 %v518, 1e+08
        %529 = vst [vmem:[%s316] sm:$0xff] %v519
        %530 = vst [vmem:[%s316 + $0x8] sm:$0xff] %v520
        %531 = vst [vmem:[%s316 + $0x10] sm:$0xff] %v521
        %532 = vst [vmem:[%s316 + $0x18] sm:$0xff] %v522
        %533 = vst [vmem:[%s316 + $0x20] sm:$0xff] %v523
        %534 = vst [vmem:[%s316 + $0x28] sm:$0xff] %v524
        %535 = vst [vmem:[%s316 + $0x30] sm:$0xff] %v525
        %536 = vst [vmem:[%s316 + $0x38] sm:$0xff] %v526
        %537 = vst [vmem:[%s316 + $0x40] sm:$0xff] %v527
        %538 = vst [vmem:[%s316 + $0x48] sm:$0xff] %v528
        %539 = vst [vmem:[%s323] sm:$0x3] %v427
        %s540 = sand.u32 %s169, 1
        %s541 = scalar_lea.sflag [#allocation5], %s540
        %s542 = sand.u32 %s169, 1
        %s543 = smul.addr %s542, 80
        %s544 = scalar_lea.vmem [#allocation8], %s543
        %s545 = sand.u32 %s195, 1
        %s546 = scalar_lea.sflag [#allocation10], %s545
        %s547 = sand.u32 %s195, 1
        %s548 = smul.addr %s547, 2
        %s549 = scalar_lea.vmem [#allocation9], %s548
        // Predicated region
        $region53: #{tpu_custom_call.1} parent=43 // pred_check
          %p550 = pneg %p179
        $region54: #{tpu_custom_call.1} parent=43 // pred_check_branch
          %552 = sbr.rel (%p550) target = $region56
        $region55: #{tpu_custom_call.1} parent=43 // pred_region
          %s553 = smul.u32 5, %s30
          %s555 = ssub.s32 1280, 1280
          %556 = vsyncadd %s541, %s555
          %s557 = smul.addr %s553, 128
          %s558 = scalar_lea.hbm %s6, %s557
          %s559 = sshll.u32 %s544, 4
          %s560 = int_to_ptr.vmem [resolvable:$true] %s559
          %565 = dma.vmem_to_hbm [thread:$0]  %s560, 1280, %s558, %s541, 640, 1280, 40
        $region56: #{tpu_custom_call.1} parent=43 // pred_fallthru
          _
        // Predicated region
        $region57: #{tpu_custom_call.1} parent=43 // pred_check
          %p566 = pneg %p205
        $region58: #{tpu_custom_call.1} parent=43 // pred_check_branch
          %568 = sbr.rel (%p566) target = $region60
        $region59: #{tpu_custom_call.1} parent=43 // pred_region
          %s570 = ssub.s32 32, 32
          %571 = vsyncadd %s546, %s570
          %s572 = smul.addr %s30, 32
          %s573 = scalar_lea.hbm %s7, %s572
          %s575 = sshll.u32 %s549, 4
          %s576 = int_to_ptr.vmem [resolvable:$true] %s575
          %578 = dma.vmem_to_hbm [thread:$0]  %s576, 32, %s573, %s546
        $region60: #{tpu_custom_call.1} parent=43 // pred_fallthru
          _
      $region44: #{tpu_custom_call.1} parent=5 // pred_fallthru
        _
      %p579 = scmp.le.s32.totalorder 2, %s25
      // Predicated region
      $region61: #{tpu_custom_call.1} parent=5 // pred_check
        %p580 = pneg %p579
      $region62: #{tpu_custom_call.1} parent=5 // pred_check_branch
        %582 = sbr.rel (%p580) target = $region64
      $region63: #{tpu_custom_call.1} parent=5 // pred_region
        %s583 = ssub.s32 %s25, 2
        // Predicated region
        $region65: #{tpu_custom_call.1} parent=63 // pred_check
          %p584 = pneg %p185
        $region66: #{tpu_custom_call.1} parent=63 // pred_check_branch
          %586 = sbr.rel (%p584) target = $region68
        $region67: #{tpu_custom_call.1} parent=63 // pred_region
          %s587 = sand.u32 %s170, 1
          %s588 = scalar_lea.sflag [#allocation5], %s587
          %s589 = sand.u32 %s170, 1
          %s590 = smul.addr %s589, 80
          %s591 = scalar_lea.vmem [#allocation8], %s590
          %592 = dma.done %s588, 1280
        $region68: #{tpu_custom_call.1} parent=63 // pred_fallthru
          _
        // Predicated region
        $region69: #{tpu_custom_call.1} parent=63 // pred_check
          %p593 = pneg %p211
        $region70: #{tpu_custom_call.1} parent=63 // pred_check_branch
          %595 = sbr.rel (%p593) target = $region72
        $region71: #{tpu_custom_call.1} parent=63 // pred_region
          %s596 = sand.u32 %s196, 1
          %s597 = scalar_lea.sflag [#allocation10], %s596
          %s598 = sand.u32 %s196, 1
          %s599 = smul.addr %s598, 2
          %s600 = scalar_lea.vmem [#allocation9], %s599
          %601 = dma.done %s597, 32
        $region72: #{tpu_custom_call.1} parent=63 // pred_fallthru
          _
      $region64: #{tpu_custom_call.1} parent=5 // pred_fallthru
        _
    $region6: #{tpu_custom_call.1} parent=1 // loop_footer
      %s29 = sadd.s32 1, %s25
    $region7: #{tpu_custom_call.1} parent=1 // loop_footer_branch
      %24 = sbr.rel target = $region3
    $region8: #{tpu_custom_call.1} parent=1 // loop_exit
      _
    %602 = vsyncpa [#allocation4], 1
    %s603 = scalar_lea.sflag [#allocation4], 1
    %604 = vsyncpa %s603, 1
    %605 = vsyncpa [#allocation7], 1
    %606 = vsyncpa [#allocation5], 1
    %s607 = scalar_lea.sflag [#allocation5], 1
    %608 = vsyncpa %s607, 1
    %609 = vsyncpa [#allocation10], 1
    %s610 = scalar_lea.sflag [#allocation10], 1
    %611 = vsyncpa %s610, 1

</llo_original>
